<compile_context>
chip_gen: v7x
topology: tpu7x:2x2x1
jax: 0.10.0
libtpu: 0.0.40
codegen_flags: <defaults>
</compile_context>

<pallas_src>
import math

import jax
import jax.numpy as jnp
from jax.experimental import pallas as pl
from jax.experimental.pallas import tpu as pltpu


def make_mlp_kernel(n_linear):
    """Kernel ref order: x, (w0, b0, w1, b1, ...), out.

    tanh after every layer except the last.  Activations are kept in f32;
    each dot casts them to the (per-layer) weight dtype so hidden layers run
    bf16 x bf16 -> f32 on the MXU while first/last layers stay f32.
    On v6e/v7x the cast could be moved *before* jnp.tanh to use the bf16 EUP
    path once the MXU is no longer the binding unit.
    """

    def kernel(x_ref, *rest):
        out_ref = rest[-1]
        params = rest[:-1]
        assert len(params) == 2 * n_linear

        h = x_ref[...]  # f32 (normalization already folded into layer 0)

        for i in range(n_linear):
            w = params[2 * i][...]          # (in_p, out_p) block-diagonal
            b = params[2 * i + 1][...]      # (1, out_p), f32
            z = jnp.dot(h.astype(w.dtype), w,
                        preferred_element_type=jnp.float32) + b
            h = jnp.tanh(z) if i < n_linear - 1 else z

        out_ref[...] = h.astype(out_ref.dtype)

    return kernel


def _round_up(x, m):
    return ((x + m - 1) // m) * m


def dnn_forward(x, lb, ub, weights, biases, *, pack=4, tile_rows=2048,
                compute="bf16", vmem_limit_bytes=None):
    """Full MLP forward in one gridded Pallas call.

    x:       (N, dim_in) float32
    lb, ub:  (1, dim_in) float32 domain bounds
    weights: list of (in_i, out_i) float32 arrays (pre-transposed nn.Linear)
    biases:  list of (1, out_i) float32 arrays
    pack:    batch rows packed along the lane axis (4 -> 128-lane hidden
             activations; try 8 on v6e/v7x for 256-wide native MXU tiles)
    tile_rows: packed rows per grid step.
    compute: "bf16" (hidden-layer MXU operands bf16, f32 accumulation) or
             "f32" (exact module semantics).
    """
    n_linear = len(weights)
    N, dim_in = x.shape
    dim_out = weights[-1].shape[1]
    f32 = jnp.float32
    hidden_dtype = jnp.bfloat16 if compute == "bf16" else jnp.float32

    # ---- host-side parameter prep (once per trace) ------------------------
    # Fold (x - lb) / (ub - lb) into layer 0 (re-association only).
    inv = 1.0 / (ub - lb)                                    # (1, dim_in)
    w0 = weights[0].astype(f32) * jnp.transpose(inv)         # diag(inv) @ W0
    b0 = biases[0].astype(f32) - jnp.dot(
        lb * inv, weights[0].astype(f32),
        precision=jax.lax.Precision.HIGHEST)
    ws = [w0] + [w.astype(f32) for w in weights[1:]]
    bs = [b0] + [b.astype(f32) for b in biases[1:]]

    # Lane packing: block-diagonal kron(I_pack, W); hidden layers -> bf16.
    eye = jnp.eye(pack, dtype=f32)
    w_p, b_p = [], []
    for i, (w, b) in enumerate(zip(ws, bs)):
        wp = jnp.kron(eye, w)                                # (p*in, p*out)
        if 0 < i < n_linear - 1:                             # hidden layers only
            wp = wp.astype(hidden_dtype)
        w_p.append(wp)
        b_p.append(jnp.tile(b, (1, pack)))                   # (1, p*out), f32

    # ---- pack the batch along lanes and pad to a whole number of tiles ----
    rows_needed = pl.cdiv(N, pack)
    tr = max(8, _round_up(int(tile_rows), 8))                # f32 sublane multiple
    max_tile = _round_up(rows_needed, 8)
    tile = min(tr, max_tile)
    if tile >= max_tile and rows_needed >= 16:
        # Keep the "parallel" grid >= 2 steps so both v7x TensorCores get work.
        tile = _round_up(pl.cdiv(rows_needed, 2), 8)
    rows = _round_up(rows_needed, tile)
    n_pad = rows * pack

    x_pad = jnp.zeros((n_pad, dim_in), dtype=f32).at[:N].set(x.astype(f32))
    x_packed = x_pad.reshape(rows, pack * dim_in)            # row-major: free repack

    grid = (rows // tile,)

    def const_spec(arr):
        # Parameters stay VMEM-resident: same (0, 0) block every grid step.
        return pl.BlockSpec(arr.shape, lambda i: (0, 0))

    in_specs = [pl.BlockSpec((tile, pack * dim_in), lambda i: (i, 0))]
    args = [x_packed]
    for w, b in zip(w_p, b_p):
        in_specs.append(const_spec(w))
        in_specs.append(const_spec(b))
        args.append(w)
        args.append(b)

    out_specs = pl.BlockSpec((tile, pack * dim_out), lambda i: (i, 0))
    out_shape = jax.ShapeDtypeStruct((rows, pack * dim_out), f32)

    cp_kwargs = dict(dimension_semantics=("parallel",))
    if vmem_limit_bytes is not None:
        cp_kwargs["vmem_limit_bytes"] = int(vmem_limit_bytes)

    out_packed = pl.pallas_call(
        make_mlp_kernel(n_linear),
        grid=grid,
        in_specs=in_specs,
        out_specs=out_specs,
        out_shape=out_shape,
        compiler_params=pltpu.CompilerParams(**cp_kwargs),
    )(*args)

    # Unpack lanes back to rows (row-major reshape) and drop padding.
    return out_packed.reshape(n_pad, dim_out)[:N].astype(x.dtype)


dnn_forward_jit = jax.jit(
    dnn_forward,
    static_argnames=("pack", "tile_rows", "compute", "vmem_limit_bytes"))


def xavier_uniform(key, fan_in, fan_out, dtype=jnp.float32):
    limit = math.sqrt(6.0 / (fan_in + fan_out))
    # Sampled as [out, in] like torch.nn.Linear.weight, then transposed to [in, out].
    w = jax.random.uniform(key, (fan_out, fan_in), dtype=dtype,
                           minval=-limit, maxval=limit)
    return w.T


def init_dnn_params(key, dim_in, dim_out, n_layer, n_node):
    """Xavier-uniform weights, zero biases (matches weights_init)."""
    dims = [dim_in] + [n_node] * (n_layer + 1) + [dim_out]
    weights, biases = [], []
    for i in range(len(dims) - 1):
        key, sub = jax.random.split(key)
        weights.append(xavier_uniform(sub, dims[i], dims[i + 1]))
        biases.append(jnp.zeros((1, dims[i + 1]), dtype=jnp.float32))
    return weights, biases


def reference_forward(x, lb, ub, weights, biases):
    """Pure-JAX reference matching the PyTorch forward (precision pinned)."""
    h = (x - lb) / (ub - lb)
    n = len(weights)
    for i, (w, b) in enumerate(zip(weights, biases)):
        h = jnp.dot(h, w, precision=jax.lax.Precision.HIGHEST) + b
        if i < n - 1:
            h = jnp.tanh(h)
    return h


if __name__ == "__main__":
    # Shapes consistent with the module: 2 inputs (x, t) -> 2 outputs
    # (real/imag parts of the NLS solution), hidden width 32.
    dim_in, dim_out = 2, 2
    n_layer, n_node = 4, 32

    key = jax.random.PRNGKey(0)
    key, kx1, kx2 = jax.random.split(key, 3)

    # Domain bounds (stand-in for [x_min, t_min] / [x_max, t_max] from the .mat file).
    lb = jnp.array([[-5.0, 0.0]], dtype=jnp.float32)
    ub = jnp.array([[5.0, 1.5707964]], dtype=jnp.float32)

    weights, biases = init_dnn_params(key, dim_in, dim_out, n_layer, n_node)

    ok = True
    for kx, batch in ((kx1, 8), (kx2, 200)):  # small + non-multiple-of-pack batch
        u = jax.random.uniform(kx, (batch, dim_in), dtype=jnp.float32)
        x = lb + u * (ub - lb)
        ref = reference_forward(x, lb, ub, weights, biases)

        # Exact-semantics path: all-f32 MXU operands.
        out_f32 = dnn_forward_jit(x, lb, ub, weights, biases, compute="f32")
        out_f32 = jax.block_until_ready(out_f32)
        assert out_f32.shape == (batch, dim_out)
        ok &= bool(jnp.allclose(out_f32, ref, atol=5e-5, rtol=5e-4))

        # Fast path: bf16 hidden-layer MXU operands, f32 accumulation.
        out_bf16 = dnn_forward_jit(x, lb, ub, weights, biases, compute="bf16")
        out_bf16 = jax.block_until_ready(out_bf16)
        assert out_bf16.shape == (batch, dim_out)
        ok &= bool(jnp.allclose(out_bf16, ref, atol=3e-2, rtol=3e-2))

    assert ok, "mismatch vs JAX reference"
    print("KERNEL_OK")
</pallas_src>

<mosaic_0001>
module attributes {stable_mosaic.version = 11 : i64} {
  func.func @kernel(%arg0: i32, %arg1: memref<8x8xf32, #tpu.memory_space<vmem>>, %arg2: memref<8x128xf32, #tpu.memory_space<vmem>>, %arg3: memref<1x128xf32, #tpu.memory_space<vmem>>, %arg4: memref<128x128xf32, #tpu.memory_space<vmem>>, %arg5: memref<1x128xf32, #tpu.memory_space<vmem>>, %arg6: memref<128x128xf32, #tpu.memory_space<vmem>>, %arg7: memref<1x128xf32, #tpu.memory_space<vmem>>, %arg8: memref<128x128xf32, #tpu.memory_space<vmem>>, %arg9: memref<1x128xf32, #tpu.memory_space<vmem>>, %arg10: memref<128x128xf32, #tpu.memory_space<vmem>>, %arg11: memref<1x128xf32, #tpu.memory_space<vmem>>, %arg12: memref<128x8xf32, #tpu.memory_space<vmem>>, %arg13: memref<1x8xf32, #tpu.memory_space<vmem>>, %arg14: memref<8x8xf32, #tpu.memory_space<vmem>>) attributes {dimension_semantics = [#tpu.dimension_semantics<parallel>], iteration_bounds = array<i64: 1>, scalar_prefetch = 0 : i64, scratch_operands = 0 : i64, tpu.core_type = #tpu.core_type<tc>, window_params = [{transform_indices = @transform_0, window_bounds = array<i64: 8, 8>}, {pipeline_mode = #tpu.pipeline_mode<synchronous>, transform_indices = @transform_1, window_bounds = array<i64: 8, 128>}, {pipeline_mode = #tpu.pipeline_mode<synchronous>, transform_indices = @transform_2, window_bounds = array<i64: 1, 128>}, {pipeline_mode = #tpu.pipeline_mode<synchronous>, transform_indices = @transform_3, window_bounds = array<i64: 128, 128>}, {pipeline_mode = #tpu.pipeline_mode<synchronous>, transform_indices = @transform_4, window_bounds = array<i64: 1, 128>}, {pipeline_mode = #tpu.pipeline_mode<synchronous>, transform_indices = @transform_5, window_bounds = array<i64: 128, 128>}, {pipeline_mode = #tpu.pipeline_mode<synchronous>, transform_indices = @transform_6, window_bounds = array<i64: 1, 128>}, {pipeline_mode = #tpu.pipeline_mode<synchronous>, transform_indices = @transform_7, window_bounds = array<i64: 128, 128>}, {pipeline_mode = #tpu.pipeline_mode<synchronous>, transform_indices = @transform_8, window_bounds = array<i64: 1, 128>}, {pipeline_mode = #tpu.pipeline_mode<synchronous>, transform_indices = @transform_9, window_bounds = array<i64: 128, 128>}, {pipeline_mode = #tpu.pipeline_mode<synchronous>, transform_indices = @transform_10, window_bounds = array<i64: 1, 128>}, {pipeline_mode = #tpu.pipeline_mode<synchronous>, transform_indices = @transform_11, window_bounds = array<i64: 128, 8>}, {pipeline_mode = #tpu.pipeline_mode<synchronous>, transform_indices = @transform_12, window_bounds = array<i64: 1, 8>}, {transform_indices = @transform_13, window_bounds = array<i64: 8, 8>}]} {
    %c0 = arith.constant 0 : index
    %c0_0 = arith.constant 0 : index
    %0 = vector.load %arg1[%c0, %c0_0] : memref<8x8xf32, #tpu.memory_space<vmem>>, vector<8x8xf32>
    %c0_1 = arith.constant 0 : index
    %c0_2 = arith.constant 0 : index
    %1 = vector.load %arg2[%c0_1, %c0_2] : memref<8x128xf32, #tpu.memory_space<vmem>>, vector<8x128xf32>
    %c0_3 = arith.constant 0 : index
    %c0_4 = arith.constant 0 : index
    %2 = vector.load %arg3[%c0_3, %c0_4] : memref<1x128xf32, #tpu.memory_space<vmem>>, vector<1x128xf32>
    %cst = arith.constant dense<0.000000e+00> : vector<8x128xf32>
    %3 = tpu.matmul %0, %1, %cst {dimension_numbers = #tpu.dot_dimension_numbers<[1], [0], [0], [1], [0, 0, 1, 1], [], []>} : vector<8x8xf32>, vector<8x128xf32>, vector<8x128xf32> -> vector<8x128xf32>
    %4 = vector.broadcast %2 : vector<1x128xf32> to vector<8x128xf32>
    %5 = arith.addf %3, %4 : vector<8x128xf32>
    %6 = math.tanh %5 : vector<8x128xf32>
    %c0_5 = arith.constant 0 : index
    %c0_6 = arith.constant 0 : index
    %7 = vector.load %arg4[%c0_5, %c0_6] : memref<128x128xf32, #tpu.memory_space<vmem>>, vector<128x128xf32>
    %c0_7 = arith.constant 0 : index
    %c0_8 = arith.constant 0 : index
    %8 = vector.load %arg5[%c0_7, %c0_8] : memref<1x128xf32, #tpu.memory_space<vmem>>, vector<1x128xf32>
    %cst_9 = arith.constant dense<0.000000e+00> : vector<8x128xf32>
    %9 = tpu.matmul %6, %7, %cst_9 {dimension_numbers = #tpu.dot_dimension_numbers<[1], [0], [0], [1], [0, 0, 1, 1], [], []>} : vector<8x128xf32>, vector<128x128xf32>, vector<8x128xf32> -> vector<8x128xf32>
    %10 = vector.broadcast %8 : vector<1x128xf32> to vector<8x128xf32>
    %11 = arith.addf %9, %10 : vector<8x128xf32>
    %12 = math.tanh %11 : vector<8x128xf32>
    %c0_10 = arith.constant 0 : index
    %c0_11 = arith.constant 0 : index
    %13 = vector.load %arg6[%c0_10, %c0_11] : memref<128x128xf32, #tpu.memory_space<vmem>>, vector<128x128xf32>
    %c0_12 = arith.constant 0 : index
    %c0_13 = arith.constant 0 : index
    %14 = vector.load %arg7[%c0_12, %c0_13] : memref<1x128xf32, #tpu.memory_space<vmem>>, vector<1x128xf32>
    %cst_14 = arith.constant dense<0.000000e+00> : vector<8x128xf32>
    %15 = tpu.matmul %12, %13, %cst_14 {dimension_numbers = #tpu.dot_dimension_numbers<[1], [0], [0], [1], [0, 0, 1, 1], [], []>} : vector<8x128xf32>, vector<128x128xf32>, vector<8x128xf32> -> vector<8x128xf32>
    %16 = vector.broadcast %14 : vector<1x128xf32> to vector<8x128xf32>
    %17 = arith.addf %15, %16 : vector<8x128xf32>
    %18 = math.tanh %17 : vector<8x128xf32>
    %c0_15 = arith.constant 0 : index
    %c0_16 = arith.constant 0 : index
    %19 = vector.load %arg8[%c0_15, %c0_16] : memref<128x128xf32, #tpu.memory_space<vmem>>, vector<128x128xf32>
    %c0_17 = arith.constant 0 : index
    %c0_18 = arith.constant 0 : index
    %20 = vector.load %arg9[%c0_17, %c0_18] : memref<1x128xf32, #tpu.memory_space<vmem>>, vector<1x128xf32>
    %cst_19 = arith.constant dense<0.000000e+00> : vector<8x128xf32>
    %21 = tpu.matmul %18, %19, %cst_19 {dimension_numbers = #tpu.dot_dimension_numbers<[1], [0], [0], [1], [0, 0, 1, 1], [], []>} : vector<8x128xf32>, vector<128x128xf32>, vector<8x128xf32> -> vector<8x128xf32>
    %22 = vector.broadcast %20 : vector<1x128xf32> to vector<8x128xf32>
    %23 = arith.addf %21, %22 : vector<8x128xf32>
    %24 = math.tanh %23 : vector<8x128xf32>
    %c0_20 = arith.constant 0 : index
    %c0_21 = arith.constant 0 : index
    %25 = vector.load %arg10[%c0_20, %c0_21] : memref<128x128xf32, #tpu.memory_space<vmem>>, vector<128x128xf32>
    %c0_22 = arith.constant 0 : index
    %c0_23 = arith.constant 0 : index
    %26 = vector.load %arg11[%c0_22, %c0_23] : memref<1x128xf32, #tpu.memory_space<vmem>>, vector<1x128xf32>
    %cst_24 = arith.constant dense<0.000000e+00> : vector<8x128xf32>
    %27 = tpu.matmul %24, %25, %cst_24 {dimension_numbers = #tpu.dot_dimension_numbers<[1], [0], [0], [1], [0, 0, 1, 1], [], []>} : vector<8x128xf32>, vector<128x128xf32>, vector<8x128xf32> -> vector<8x128xf32>
    %28 = vector.broadcast %26 : vector<1x128xf32> to vector<8x128xf32>
    %29 = arith.addf %27, %28 : vector<8x128xf32>
    %30 = math.tanh %29 : vector<8x128xf32>
    %c0_25 = arith.constant 0 : index
    %c0_26 = arith.constant 0 : index
    %31 = vector.load %arg12[%c0_25, %c0_26] : memref<128x8xf32, #tpu.memory_space<vmem>>, vector<128x8xf32>
    %c0_27 = arith.constant 0 : index
    %c0_28 = arith.constant 0 : index
    %32 = vector.load %arg13[%c0_27, %c0_28] : memref<1x8xf32, #tpu.memory_space<vmem>>, vector<1x8xf32>
    %cst_29 = arith.constant dense<0.000000e+00> : vector<8x8xf32>
    %33 = tpu.matmul %30, %31, %cst_29 {dimension_numbers = #tpu.dot_dimension_numbers<[1], [0], [0], [1], [0, 0, 1, 1], [], []>} : vector<8x128xf32>, vector<128x8xf32>, vector<8x8xf32> -> vector<8x8xf32>
    %34 = vector.broadcast %32 : vector<1x8xf32> to vector<8x8xf32>
    %35 = arith.addf %33, %34 : vector<8x8xf32>
    %c0_30 = arith.constant 0 : index
    %c0_31 = arith.constant 0 : index
    %36 = vector.load %arg14[%c0_30, %c0_31] : memref<8x8xf32, #tpu.memory_space<vmem>>, vector<8x8xf32>
    tpu.vector_store %arg14[%c0_30, %c0_31], %35 {strides = array<i32>} : memref<8x8xf32, #tpu.memory_space<vmem>>, vector<8x8xf32>,
    return
  }
  func.func @transform_0(%arg0: i32) -> (i32, i32) {
    %c0_i32 = arith.constant 0 : i32
    %c0_i32_0 = arith.constant 0 : i32
    return %arg0, %c0_i32 : i32, i32
  }
  func.func @transform_1(%arg0: i32) -> (i32, i32) {
    %c0_i32 = arith.constant 0 : i32
    %c0_i32_0 = arith.constant 0 : i32
    %c0_i32_1 = arith.constant 0 : i32
    return %c0_i32, %c0_i32_0 : i32, i32
  }
  func.func @transform_2(%arg0: i32) -> (i32, i32) {
    %c0_i32 = arith.constant 0 : i32
    %c0_i32_0 = arith.constant 0 : i32
    %c0_i32_1 = arith.constant 0 : i32
    return %c0_i32, %c0_i32_0 : i32, i32
  }
  func.func @transform_3(%arg0: i32) -> (i32, i32) {
    %c0_i32 = arith.constant 0 : i32
    %c0_i32_0 = arith.constant 0 : i32
    %c0_i32_1 = arith.constant 0 : i32
    return %c0_i32, %c0_i32_0 : i32, i32
  }
  func.func @transform_4(%arg0: i32) -> (i32, i32) {
    %c0_i32 = arith.constant 0 : i32
    %c0_i32_0 = arith.constant 0 : i32
    %c0_i32_1 = arith.constant 0 : i32
    return %c0_i32, %c0_i32_0 : i32, i32
  }
  func.func @transform_5(%arg0: i32) -> (i32, i32) {
    %c0_i32 = arith.constant 0 : i32
    %c0_i32_0 = arith.constant 0 : i32
    %c0_i32_1 = arith.constant 0 : i32
    return %c0_i32, %c0_i32_0 : i32, i32
  }
  func.func @transform_6(%arg0: i32) -> (i32, i32) {
    %c0_i32 = arith.constant 0 : i32
    %c0_i32_0 = arith.constant 0 : i32
    %c0_i32_1 = arith.constant 0 : i32
    return %c0_i32, %c0_i32_0 : i32, i32
  }
  func.func @transform_7(%arg0: i32) -> (i32, i32) {
    %c0_i32 = arith.constant 0 : i32
    %c0_i32_0 = arith.constant 0 : i32
    %c0_i32_1 = arith.constant 0 : i32
    return %c0_i32, %c0_i32_0 : i32, i32
  }
  func.func @transform_8(%arg0: i32) -> (i32, i32) {
    %c0_i32 = arith.constant 0 : i32
    %c0_i32_0 = arith.constant 0 : i32
    %c0_i32_1 = arith.constant 0 : i32
    return %c0_i32, %c0_i32_0 : i32, i32
  }
  func.func @transform_9(%arg0: i32) -> (i32, i32) {
    %c0_i32 = arith.constant 0 : i32
    %c0_i32_0 = arith.constant 0 : i32
    %c0_i32_1 = arith.constant 0 : i32
    return %c0_i32, %c0_i32_0 : i32, i32
  }
  func.func @transform_10(%arg0: i32) -> (i32, i32) {
    %c0_i32 = arith.constant 0 : i32
    %c0_i32_0 = arith.constant 0 : i32
    %c0_i32_1 = arith.constant 0 : i32
    return %c0_i32, %c0_i32_0 : i32, i32
  }
  func.func @transform_11(%arg0: i32) -> (i32, i32) {
    %c0_i32 = arith.constant 0 : i32
    %c0_i32_0 = arith.constant 0 : i32
    %c0_i32_1 = arith.constant 0 : i32
    return %c0_i32, %c0_i32_0 : i32, i32
  }
  func.func @transform_12(%arg0: i32) -> (i32, i32) {
    %c0_i32 = arith.constant 0 : i32
    %c0_i32_0 = arith.constant 0 : i32
    %c0_i32_1 = arith.constant 0 : i32
    return %c0_i32, %c0_i32_0 : i32, i32
  }
  func.func @transform_13(%arg0: i32) -> (i32, i32) {
    %c0_i32 = arith.constant 0 : i32
    %c0_i32_0 = arith.constant 0 : i32
    return %arg0, %c0_i32 : i32, i32
  }
}

</mosaic_0001>

<llo_original>
// kernel: dnn_forward.1
$region0: #{dnn_forward.1}
  #allocation0 [shape = 'u32[]', space=smem, size = 0x4, offset = 0x4, fixed_abs, tag = 'smem constant byte address 0x4 - core index']
  #allocation1 [shape = 'u32[144,128]{1,0:T(1,128)}', space=vmem, size = 0x12000, scoped, tag = 'internal scratch']
  %s0 = inlined_call_operand.vmem [shape: f32[8,8], index: 0, kind: input, shape index: {}]
  %s1 = inlined_call_operand.vmem [shape: f32[8,128], index: 1, kind: input, shape index: {}]
  %s2 = inlined_call_operand.vmem [shape: f32[1,128], index: 2, kind: input, shape index: {}]
  %s3 = inlined_call_operand.vmem [shape: f32[128,128], index: 3, kind: input, shape index: {}]
  %s4 = inlined_call_operand.vmem [shape: f32[1,128], index: 4, kind: input, shape index: {}]
  %s5 = inlined_call_operand.vmem [shape: f32[128,128], index: 5, kind: input, shape index: {}]
  %s6 = inlined_call_operand.vmem [shape: f32[1,128], index: 6, kind: input, shape index: {}]
  %s7 = inlined_call_operand.vmem [shape: f32[128,128], index: 7, kind: input, shape index: {}]
  %s8 = inlined_call_operand.vmem [shape: f32[1,128], index: 8, kind: input, shape index: {}]
  %s9 = inlined_call_operand.vmem [shape: f32[128,128], index: 9, kind: input, shape index: {}]
  %s10 = inlined_call_operand.vmem [shape: f32[1,128], index: 10, kind: input, shape index: {}]
  %s11 = inlined_call_operand.vmem [shape: f32[128,8], index: 11, kind: input, shape index: {}]
  %s12 = inlined_call_operand.vmem [shape: f32[1,8], index: 12, kind: input, shape index: {}]
  %s13 = inlined_call_operand.vmem [shape: f32[8,8], index: 13, kind: output, shape index: {}]
  %s14 = sld [smem:[#allocation0]]
  $region62: #{dnn_forward.1} parent=0
    _
  %s16 = ssub.s32 1, %s14
  %s17 = scalar_select 0, %s16, %s14
  // Predicated region
  $region2: #{dnn_forward.1} parent=0 // pred_check
    _
  $region3: #{dnn_forward.1} parent=0 // pred_check_branch
    %19 = sbr.rel (0) target = $region5
  $region4: #{dnn_forward.1} parent=0 // pred_region
    _
  $region5: #{dnn_forward.1} parent=0 // pred_fallthru
    _
  // Predicated region
  $region6: #{dnn_forward.1} parent=0 // pred_check
    _
  $region7: #{dnn_forward.1} parent=0 // pred_check_branch
    %21 = sbr.rel (0) target = $region9
  $region8: #{dnn_forward.1} parent=0 // pred_region
    _
  $region9: #{dnn_forward.1} parent=0 // pred_fallthru
    _
  // Predicated region
  $region10: #{dnn_forward.1} parent=0 // pred_check
    _
  $region11: #{dnn_forward.1} parent=0 // pred_check_branch
    %23 = sbr.rel (0) target = $region13
  $region12: #{dnn_forward.1} parent=0 // pred_region
    _
  $region13: #{dnn_forward.1} parent=0 // pred_fallthru
    _
  // Predicated region
  $region14: #{dnn_forward.1} parent=0 // pred_check
    _
  $region15: #{dnn_forward.1} parent=0 // pred_check_branch
    %25 = sbr.rel (0) target = $region17
  $region16: #{dnn_forward.1} parent=0 // pred_region
    _
  $region17: #{dnn_forward.1} parent=0 // pred_fallthru
    _
  // Predicated region
  $region18: #{dnn_forward.1} parent=0 // pred_check
    _
  $region19: #{dnn_forward.1} parent=0 // pred_check_branch
    %27 = sbr.rel (0) target = $region21
  $region20: #{dnn_forward.1} parent=0 // pred_region
    _
  $region21: #{dnn_forward.1} parent=0 // pred_fallthru
    _
  // Predicated region
  $region22: #{dnn_forward.1} parent=0 // pred_check
    _
  $region23: #{dnn_forward.1} parent=0 // pred_check_branch
    %29 = sbr.rel (0) target = $region25
  $region24: #{dnn_forward.1} parent=0 // pred_region
    _
  $region25: #{dnn_forward.1} parent=0 // pred_fallthru
    _
  // Predicated region
  $region26: #{dnn_forward.1} parent=0 // pred_check
    _
  $region27: #{dnn_forward.1} parent=0 // pred_check_branch
    %31 = sbr.rel (0) target = $region29
  $region28: #{dnn_forward.1} parent=0 // pred_region
    _
  $region29: #{dnn_forward.1} parent=0 // pred_fallthru
    _
  // Predicated region
  $region30: #{dnn_forward.1} parent=0 // pred_check
    _
  $region31: #{dnn_forward.1} parent=0 // pred_check_branch
    %33 = sbr.rel (0) target = $region33
  $region32: #{dnn_forward.1} parent=0 // pred_region
    _
  $region33: #{dnn_forward.1} parent=0 // pred_fallthru
    _
  // Predicated region
  $region34: #{dnn_forward.1} parent=0 // pred_check
    _
  $region35: #{dnn_forward.1} parent=0 // pred_check_branch
    %35 = sbr.rel (0) target = $region37
  $region36: #{dnn_forward.1} parent=0 // pred_region
    _
  $region37: #{dnn_forward.1} parent=0 // pred_fallthru
    _
  // Predicated region
  $region38: #{dnn_forward.1} parent=0 // pred_check
    _
  $region39: #{dnn_forward.1} parent=0 // pred_check_branch
    %37 = sbr.rel (0) target = $region41
  $region40: #{dnn_forward.1} parent=0 // pred_region
    _
  $region41: #{dnn_forward.1} parent=0 // pred_fallthru
    _
  // Predicated region
  $region42: #{dnn_forward.1} parent=0 // pred_check
    _
  $region43: #{dnn_forward.1} parent=0 // pred_check_branch
    %39 = sbr.rel (0) target = $region45
  $region44: #{dnn_forward.1} parent=0 // pred_region
    _
  $region45: #{dnn_forward.1} parent=0 // pred_fallthru
    _
  // Predicated region
  $region46: #{dnn_forward.1} parent=0 // pred_check
    _
  $region47: #{dnn_forward.1} parent=0 // pred_check_branch
    %41 = sbr.rel (0) target = $region49
  $region48: #{dnn_forward.1} parent=0 // pred_region
    _
  $region49: #{dnn_forward.1} parent=0 // pred_fallthru
    _
  // Predicated region
  $region50: #{dnn_forward.1} parent=0 // pred_check
    _
  $region51: #{dnn_forward.1} parent=0 // pred_check_branch
    %43 = sbr.rel (0) target = $region53
  $region52: #{dnn_forward.1} parent=0 // pred_region
    _
  $region53: #{dnn_forward.1} parent=0 // pred_fallthru
    _
  %v44 = vld [vmem:[%s0] sm:$0xff]
  %v45 = vld [vmem:[%s1] sm:$0xff]
  %v46 = vld [vmem:[%s2] sm:$0x1]
  %v48 = vlaneseq
  %v49 = vshrl.u32 %v48, 7
  %v50 = vsub.s32 0, %v49
  %v51 = vrot.slane %v46, %v50
  %vm53 = vcmask 64512
  %v55 = vsel %vm53, %v44, 0
  %57 = vmatprep.subr.mxu0 0.0
  %58 = vmatpush1.msra.mxu0 %v45
  %59 = vmatprep.subr.mxu0 0.0
  %60 = vmatpush1.msra.mxu0 0.0
  %61 = vmatprep.subr.mxu0 0.0
  %62 = vmatpush1.msra.mxu0 0.0
  %63 = vmatprep.subr.mxu0 0.0
  %64 = vmatpush1.msra.mxu0 0.0
  %65 = vmatprep.subr.mxu0 0.0
  %66 = vmatpush1.msra.mxu0 0.0
  %67 = vmatprep.subr.mxu0 0.0
  %68 = vmatpush1.msra.mxu0 0.0
  %69 = vmatprep.subr.mxu0 0.0
  %70 = vmatpush1.msra.mxu0 0.0
  %71 = vmatprep.subr.mxu0 0.0
  %72 = vmatpush1.msra.mxu0 0.0
  %73 = vmatprep.subr.mxu0 0.0
  %74 = vmatpush1.msra.mxu0 0.0
  %75 = vmatprep.subr.mxu0 0.0
  %76 = vmatpush1.msra.mxu0 0.0
  %77 = vmatprep.subr.mxu0 0.0
  %78 = vmatpush1.msra.mxu0 0.0
  %79 = vmatprep.subr.mxu0 0.0
  %80 = vmatpush1.msra.mxu0 0.0
  %81 = vmatprep.subr.mxu0 0.0
  %82 = vmatpush1.msra.mxu0 0.0
  %83 = vmatprep.subr.mxu0 0.0
  %84 = vmatpush1.msra.mxu0 0.0
  %85 = vmatprep.subr.mxu0 0.0
  %86 = vmatpush1.msra.mxu0 0.0
  %87 = vmatprep.subr.mxu0 0.0
  %88 = vmatpush1.msra.mxu0 0.0
  %89 = vmatprep.subr.mxu0 0.0
  %90 = vmatpush1.msra.mxu0 0.0
  %91 = vmatprep.subr.mxu0 0.0
  %92 = vmatpush1.msra.mxu0 0.0
  %93 = vmatprep.subr.mxu0 0.0
  %94 = vmatpush1.msra.mxu0 0.0
  %95 = vmatprep.subr.mxu0 0.0
  %96 = vmatpush1.msra.mxu0 0.0
  %97 = vmatprep.subr.mxu0 0.0
  %98 = vmatpush1.msra.mxu0 0.0
  %99 = vmatprep.subr.mxu0 0.0
  %100 = vmatpush1.msra.mxu0 0.0
  %101 = vmatprep.subr.mxu0 0.0
  %102 = vmatpush1.msra.mxu0 0.0
  %103 = vmatprep.subr.mxu0 0.0
  %104 = vmatpush1.msra.mxu0 0.0
  %105 = vmatprep.subr.mxu0 0.0
  %106 = vmatpush1.msra.mxu0 0.0
  %107 = vmatprep.subr.mxu0 0.0
  %108 = vmatpush1.msra.mxu0 0.0
  %109 = vmatprep.subr.mxu0 0.0
  %110 = vmatpush1.msra.mxu0 0.0
  %111 = vmatprep.subr.mxu0 0.0
  %112 = vmatpush1.msra.mxu0 0.0
  %113 = vmatprep.subr.mxu0 0.0
  %114 = vmatpush1.msra.mxu0 0.0
  %115 = vmatprep.subr.mxu0 0.0
  %116 = vmatpush1.msra.mxu0 0.0
  %117 = vmatprep.subr.mxu0 0.0
  %118 = vmatpush1.msra.mxu0 0.0
  %119 = vmatprep.subr.mxu0 0.0
  %120 = vmatpush1.msra.mxu0 0.0
  %121 = vmatprep.mubr.f32.mxu0 0.0
  %122 = vmatmul.mubr.f32.gmra.mrb[0].mxu0 %v55
  %v123 = vpop.f32.mrb[0].mxu0
  %v124 = vadd.f32 %v51, %v123
  %v125 = vpop.f32.mrb[0].mxu0
  %126 = vdwg.mxu0
  %v127 = vtanh.pop %v124
  %v128 = vld [vmem:[%s3] sm:$0xff]
  %v129 = vld [vmem:[%s3 + $0x8] sm:$0xff]
  %v130 = vld [vmem:[%s3 + $0x10] sm:$0xff]
  %v131 = vld [vmem:[%s3 + $0x18] sm:$0xff]
  %v132 = vld [vmem:[%s3 + $0x20] sm:$0xff]
  %v133 = vld [vmem:[%s3 + $0x28] sm:$0xff]
  %v134 = vld [vmem:[%s3 + $0x30] sm:$0xff]
  %v135 = vld [vmem:[%s3 + $0x38] sm:$0xff]
  %v136 = vld [vmem:[%s3 + $0x40] sm:$0xff]
  %v137 = vld [vmem:[%s3 + $0x48] sm:$0xff]
  %v138 = vld [vmem:[%s3 + $0x50] sm:$0xff]
  %v139 = vld [vmem:[%s3 + $0x58] sm:$0xff]
  %v140 = vld [vmem:[%s3 + $0x60] sm:$0xff]
  %v141 = vld [vmem:[%s3 + $0x68] sm:$0xff]
  %v142 = vld [vmem:[%s3 + $0x70] sm:$0xff]
  %v143 = vld [vmem:[%s3 + $0x78] sm:$0xff]
  %v144 = vld [vmem:[%s4] sm:$0x1]
  %v146 = vlaneseq
  %v147 = vshrl.u32 %v146, 7
  %v148 = vsub.s32 0, %v147
  %v149 = vrot.slane %v144, %v148
  %151 = vmatprep.subr.mxu0 0.0
  %152 = vmatpush1.msra.mxu0 %v128
  %153 = vmatprep.subr.mxu0 0.0
  %154 = vmatpush1.msra.mxu0 %v129
  %155 = vmatprep.subr.mxu0 0.0
  %156 = vmatpush1.msra.mxu0 %v130
  %157 = vmatprep.subr.mxu0 0.0
  %158 = vmatpush1.msra.mxu0 %v131
  %159 = vmatprep.subr.mxu0 0.0
  %160 = vmatpush1.msra.mxu0 %v132
  %161 = vmatprep.subr.mxu0 0.0
  %162 = vmatpush1.msra.mxu0 %v133
  %163 = vmatprep.subr.mxu0 0.0
  %164 = vmatpush1.msra.mxu0 %v134
  %165 = vmatprep.subr.mxu0 0.0
  %166 = vmatpush1.msra.mxu0 %v135
  %167 = vmatprep.subr.mxu0 0.0
  %168 = vmatpush1.msra.mxu0 %v136
  %169 = vmatprep.subr.mxu0 0.0
  %170 = vmatpush1.msra.mxu0 %v137
  %171 = vmatprep.subr.mxu0 0.0
  %172 = vmatpush1.msra.mxu0 %v138
  %173 = vmatprep.subr.mxu0 0.0
  %174 = vmatpush1.msra.mxu0 %v139
  %175 = vmatprep.subr.mxu0 0.0
  %176 = vmatpush1.msra.mxu0 %v140
  %177 = vmatprep.subr.mxu0 0.0
  %178 = vmatpush1.msra.mxu0 %v141
  %179 = vmatprep.subr.mxu0 0.0
  %180 = vmatpush1.msra.mxu0 %v142
  %181 = vmatprep.subr.mxu0 0.0
  %182 = vmatpush1.msra.mxu0 %v143
  %183 = vmatprep.subr.mxu0 0.0
  %184 = vmatpush1.msra.mxu0 0.0
  %185 = vmatprep.subr.mxu0 0.0
  %186 = vmatpush1.msra.mxu0 0.0
  %187 = vmatprep.subr.mxu0 0.0
  %188 = vmatpush1.msra.mxu0 0.0
  %189 = vmatprep.subr.mxu0 0.0
  %190 = vmatpush1.msra.mxu0 0.0
  %191 = vmatprep.subr.mxu0 0.0
  %192 = vmatpush1.msra.mxu0 0.0
  %193 = vmatprep.subr.mxu0 0.0
  %194 = vmatpush1.msra.mxu0 0.0
  %195 = vmatprep.subr.mxu0 0.0
  %196 = vmatpush1.msra.mxu0 0.0
  %197 = vmatprep.subr.mxu0 0.0
  %198 = vmatpush1.msra.mxu0 0.0
  %199 = vmatprep.subr.mxu0 0.0
  %200 = vmatpush1.msra.mxu0 0.0
  %201 = vmatprep.subr.mxu0 0.0
  %202 = vmatpush1.msra.mxu0 0.0
  %203 = vmatprep.subr.mxu0 0.0
  %204 = vmatpush1.msra.mxu0 0.0
  %205 = vmatprep.subr.mxu0 0.0
  %206 = vmatpush1.msra.mxu0 0.0
  %207 = vmatprep.subr.mxu0 0.0
  %208 = vmatpush1.msra.mxu0 0.0
  %209 = vmatprep.subr.mxu0 0.0
  %210 = vmatpush1.msra.mxu0 0.0
  %211 = vmatprep.subr.mxu0 0.0
  %212 = vmatpush1.msra.mxu0 0.0
  %213 = vmatprep.subr.mxu0 0.0
  %214 = vmatpush1.msra.mxu0 0.0
  %215 = vmatprep.mubr.f32.mxu0 0.0
  %216 = vmatmul.mubr.f32.gmra.mrb[0].mxu0 %v127
  %v217 = vpop.f32.mrb[0].mxu0
  %v218 = vadd.f32 %v149, %v217
  %v219 = vpop.f32.mrb[0].mxu0
  %220 = vdwg.mxu0
  %v221 = vtanh.pop %v218
  %v222 = vld [vmem:[%s5] sm:$0xff]
  %v223 = vld [vmem:[%s5 + $0x8] sm:$0xff]
  %v224 = vld [vmem:[%s5 + $0x10] sm:$0xff]
  %v225 = vld [vmem:[%s5 + $0x18] sm:$0xff]
  %v226 = vld [vmem:[%s5 + $0x20] sm:$0xff]
  %v227 = vld [vmem:[%s5 + $0x28] sm:$0xff]
  %v228 = vld [vmem:[%s5 + $0x30] sm:$0xff]
  %v229 = vld [vmem:[%s5 + $0x38] sm:$0xff]
  %v230 = vld [vmem:[%s5 + $0x40] sm:$0xff]
  %v231 = vld [vmem:[%s5 + $0x48] sm:$0xff]
  %v232 = vld [vmem:[%s5 + $0x50] sm:$0xff]
  %v233 = vld [vmem:[%s5 + $0x58] sm:$0xff]
  %v234 = vld [vmem:[%s5 + $0x60] sm:$0xff]
  %v235 = vld [vmem:[%s5 + $0x68] sm:$0xff]
  %v236 = vld [vmem:[%s5 + $0x70] sm:$0xff]
  %v237 = vld [vmem:[%s5 + $0x78] sm:$0xff]
  %v238 = vld [vmem:[%s6] sm:$0x1]
  %v240 = vlaneseq
  %v241 = vshrl.u32 %v240, 7
  %v242 = vsub.s32 0, %v241
  %v243 = vrot.slane %v238, %v242
  %245 = vmatprep.subr.mxu0 0.0
  %246 = vmatpush1.msra.mxu0 %v222
  %247 = vmatprep.subr.mxu0 0.0
  %248 = vmatpush1.msra.mxu0 %v223
  %249 = vmatprep.subr.mxu0 0.0
  %250 = vmatpush1.msra.mxu0 %v224
  %251 = vmatprep.subr.mxu0 0.0
  %252 = vmatpush1.msra.mxu0 %v225
  %253 = vmatprep.subr.mxu0 0.0
  %254 = vmatpush1.msra.mxu0 %v226
  %255 = vmatprep.subr.mxu0 0.0
  %256 = vmatpush1.msra.mxu0 %v227
  %257 = vmatprep.subr.mxu0 0.0
  %258 = vmatpush1.msra.mxu0 %v228
  %259 = vmatprep.subr.mxu0 0.0
  %260 = vmatpush1.msra.mxu0 %v229
  %261 = vmatprep.subr.mxu0 0.0
  %262 = vmatpush1.msra.mxu0 %v230
  %263 = vmatprep.subr.mxu0 0.0
  %264 = vmatpush1.msra.mxu0 %v231
  %265 = vmatprep.subr.mxu0 0.0
  %266 = vmatpush1.msra.mxu0 %v232
  %267 = vmatprep.subr.mxu0 0.0
  %268 = vmatpush1.msra.mxu0 %v233
  %269 = vmatprep.subr.mxu0 0.0
  %270 = vmatpush1.msra.mxu0 %v234
  %271 = vmatprep.subr.mxu0 0.0
  %272 = vmatpush1.msra.mxu0 %v235
  %273 = vmatprep.subr.mxu0 0.0
  %274 = vmatpush1.msra.mxu0 %v236
  %275 = vmatprep.subr.mxu0 0.0
  %276 = vmatpush1.msra.mxu0 %v237
  %277 = vmatprep.subr.mxu0 0.0
  %278 = vmatpush1.msra.mxu0 0.0
  %279 = vmatprep.subr.mxu0 0.0
  %280 = vmatpush1.msra.mxu0 0.0
  %281 = vmatprep.subr.mxu0 0.0
  %282 = vmatpush1.msra.mxu0 0.0
  %283 = vmatprep.subr.mxu0 0.0
  %284 = vmatpush1.msra.mxu0 0.0
  %285 = vmatprep.subr.mxu0 0.0
  %286 = vmatpush1.msra.mxu0 0.0
  %287 = vmatprep.subr.mxu0 0.0
  %288 = vmatpush1.msra.mxu0 0.0
  %289 = vmatprep.subr.mxu0 0.0
  %290 = vmatpush1.msra.mxu0 0.0
  %291 = vmatprep.subr.mxu0 0.0
  %292 = vmatpush1.msra.mxu0 0.0
  %293 = vmatprep.subr.mxu0 0.0
  %294 = vmatpush1.msra.mxu0 0.0
  %295 = vmatprep.subr.mxu0 0.0
  %296 = vmatpush1.msra.mxu0 0.0
  %297 = vmatprep.subr.mxu0 0.0
  %298 = vmatpush1.msra.mxu0 0.0
  %299 = vmatprep.subr.mxu0 0.0
  %300 = vmatpush1.msra.mxu0 0.0
  %301 = vmatprep.subr.mxu0 0.0
  %302 = vmatpush1.msra.mxu0 0.0
  %303 = vmatprep.subr.mxu0 0.0
  %304 = vmatpush1.msra.mxu0 0.0
  %305 = vmatprep.subr.mxu0 0.0
  %306 = vmatpush1.msra.mxu0 0.0
  %307 = vmatprep.subr.mxu0 0.0
  %308 = vmatpush1.msra.mxu0 0.0
  %309 = vmatprep.mubr.f32.mxu0 0.0
  %310 = vmatmul.mubr.f32.gmra.mrb[0].mxu0 %v221
  %v311 = vpop.f32.mrb[0].mxu0
  %v312 = vadd.f32 %v243, %v311
  %v313 = vpop.f32.mrb[0].mxu0
  %314 = vdwg.mxu0
  %v315 = vtanh.pop %v312
  %v316 = vld [vmem:[%s7] sm:$0xff]
  %v317 = vld [vmem:[%s7 + $0x8] sm:$0xff]
  %v318 = vld [vmem:[%s7 + $0x10] sm:$0xff]
  %v319 = vld [vmem:[%s7 + $0x18] sm:$0xff]
  %v320 = vld [vmem:[%s7 + $0x20] sm:$0xff]
  %v321 = vld [vmem:[%s7 + $0x28] sm:$0xff]
  %v322 = vld [vmem:[%s7 + $0x30] sm:$0xff]
  %v323 = vld [vmem:[%s7 + $0x38] sm:$0xff]
  %v324 = vld [vmem:[%s7 + $0x40] sm:$0xff]
  %v325 = vld [vmem:[%s7 + $0x48] sm:$0xff]
  %v326 = vld [vmem:[%s7 + $0x50] sm:$0xff]
  %v327 = vld [vmem:[%s7 + $0x58] sm:$0xff]
  %v328 = vld [vmem:[%s7 + $0x60] sm:$0xff]
  %v329 = vld [vmem:[%s7 + $0x68] sm:$0xff]
  %v330 = vld [vmem:[%s7 + $0x70] sm:$0xff]
  %v331 = vld [vmem:[%s7 + $0x78] sm:$0xff]
  %v332 = vld [vmem:[%s8] sm:$0x1]
  %v334 = vlaneseq
  %v335 = vshrl.u32 %v334, 7
  %v336 = vsub.s32 0, %v335
  %v337 = vrot.slane %v332, %v336
  %339 = vmatprep.subr.mxu0 0.0
  %340 = vmatpush1.msra.mxu0 %v316
  %341 = vmatprep.subr.mxu0 0.0
  %342 = vmatpush1.msra.mxu0 %v317
  %343 = vmatprep.subr.mxu0 0.0
  %344 = vmatpush1.msra.mxu0 %v318
  %345 = vmatprep.subr.mxu0 0.0
  %346 = vmatpush1.msra.mxu0 %v319
  %347 = vmatprep.subr.mxu0 0.0
  %348 = vmatpush1.msra.mxu0 %v320
  %349 = vmatprep.subr.mxu0 0.0
  %350 = vmatpush1.msra.mxu0 %v321
  %351 = vmatprep.subr.mxu0 0.0
  %352 = vmatpush1.msra.mxu0 %v322
  %353 = vmatprep.subr.mxu0 0.0
  %354 = vmatpush1.msra.mxu0 %v323
  %355 = vmatprep.subr.mxu0 0.0
  %356 = vmatpush1.msra.mxu0 %v324
  %357 = vmatprep.subr.mxu0 0.0
  %358 = vmatpush1.msra.mxu0 %v325
  %359 = vmatprep.subr.mxu0 0.0
  %360 = vmatpush1.msra.mxu0 %v326
  %361 = vmatprep.subr.mxu0 0.0
  %362 = vmatpush1.msra.mxu0 %v327
  %363 = vmatprep.subr.mxu0 0.0
  %364 = vmatpush1.msra.mxu0 %v328
  %365 = vmatprep.subr.mxu0 0.0
  %366 = vmatpush1.msra.mxu0 %v329
  %367 = vmatprep.subr.mxu0 0.0
  %368 = vmatpush1.msra.mxu0 %v330
  %369 = vmatprep.subr.mxu0 0.0
  %370 = vmatpush1.msra.mxu0 %v331
  %371 = vmatprep.subr.mxu0 0.0
  %372 = vmatpush1.msra.mxu0 0.0
  %373 = vmatprep.subr.mxu0 0.0
  %374 = vmatpush1.msra.mxu0 0.0
  %375 = vmatprep.subr.mxu0 0.0
  %376 = vmatpush1.msra.mxu0 0.0
  %377 = vmatprep.subr.mxu0 0.0
  %378 = vmatpush1.msra.mxu0 0.0
  %379 = vmatprep.subr.mxu0 0.0
  %380 = vmatpush1.msra.mxu0 0.0
  %381 = vmatprep.subr.mxu0 0.0
  %382 = vmatpush1.msra.mxu0 0.0
  %383 = vmatprep.subr.mxu0 0.0
  %384 = vmatpush1.msra.mxu0 0.0
  %385 = vmatprep.subr.mxu0 0.0
  %386 = vmatpush1.msra.mxu0 0.0
  %387 = vmatprep.subr.mxu0 0.0
  %388 = vmatpush1.msra.mxu0 0.0
  %389 = vmatprep.subr.mxu0 0.0
  %390 = vmatpush1.msra.mxu0 0.0
  %391 = vmatprep.subr.mxu0 0.0
  %392 = vmatpush1.msra.mxu0 0.0
  %393 = vmatprep.subr.mxu0 0.0
  %394 = vmatpush1.msra.mxu0 0.0
  %395 = vmatprep.subr.mxu0 0.0
  %396 = vmatpush1.msra.mxu0 0.0
  %397 = vmatprep.subr.mxu0 0.0
  %398 = vmatpush1.msra.mxu0 0.0
  %399 = vmatprep.subr.mxu0 0.0
  %400 = vmatpush1.msra.mxu0 0.0
  %401 = vmatprep.subr.mxu0 0.0
  %402 = vmatpush1.msra.mxu0 0.0
  %403 = vmatprep.mubr.f32.mxu0 0.0
  %404 = vmatmul.mubr.f32.gmra.mrb[0].mxu0 %v315
  %v405 = vpop.f32.mrb[0].mxu0
  %v406 = vadd.f32 %v337, %v405
  %v407 = vpop.f32.mrb[0].mxu0
  %408 = vdwg.mxu0
  %v409 = vtanh.pop %v406
  %v410 = vld [vmem:[%s9] sm:$0xff]
  %v411 = vld [vmem:[%s9 + $0x8] sm:$0xff]
  %v412 = vld [vmem:[%s9 + $0x10] sm:$0xff]
  %v413 = vld [vmem:[%s9 + $0x18] sm:$0xff]
  %v414 = vld [vmem:[%s9 + $0x20] sm:$0xff]
  %v415 = vld [vmem:[%s9 + $0x28] sm:$0xff]
  %v416 = vld [vmem:[%s9 + $0x30] sm:$0xff]
  %v417 = vld [vmem:[%s9 + $0x38] sm:$0xff]
  %v418 = vld [vmem:[%s9 + $0x40] sm:$0xff]
  %v419 = vld [vmem:[%s9 + $0x48] sm:$0xff]
  %v420 = vld [vmem:[%s9 + $0x50] sm:$0xff]
  %v421 = vld [vmem:[%s9 + $0x58] sm:$0xff]
  %v422 = vld [vmem:[%s9 + $0x60] sm:$0xff]
  %v423 = vld [vmem:[%s9 + $0x68] sm:$0xff]
  %v424 = vld [vmem:[%s9 + $0x70] sm:$0xff]
  %v425 = vld [vmem:[%s9 + $0x78] sm:$0xff]
  %v426 = vld [vmem:[%s10] sm:$0x1]
  %v428 = vlaneseq
  %v429 = vshrl.u32 %v428, 7
  %v430 = vsub.s32 0, %v429
  %v431 = vrot.slane %v426, %v430
  %433 = vmatprep.subr.mxu0 0.0
  %434 = vmatpush1.msra.mxu0 %v410
  %435 = vmatprep.subr.mxu0 0.0
  %436 = vmatpush1.msra.mxu0 %v411
  %437 = vmatprep.subr.mxu0 0.0
  %438 = vmatpush1.msra.mxu0 %v412
  %439 = vmatprep.subr.mxu0 0.0
  %440 = vmatpush1.msra.mxu0 %v413
  %441 = vmatprep.subr.mxu0 0.0
  %442 = vmatpush1.msra.mxu0 %v414
  %443 = vmatprep.subr.mxu0 0.0
  %444 = vmatpush1.msra.mxu0 %v415
  %445 = vmatprep.subr.mxu0 0.0
  %446 = vmatpush1.msra.mxu0 %v416
  %447 = vmatprep.subr.mxu0 0.0
  %448 = vmatpush1.msra.mxu0 %v417
  %449 = vmatprep.subr.mxu0 0.0
  %450 = vmatpush1.msra.mxu0 %v418
  %451 = vmatprep.subr.mxu0 0.0
  %452 = vmatpush1.msra.mxu0 %v419
  %453 = vmatprep.subr.mxu0 0.0
  %454 = vmatpush1.msra.mxu0 %v420
  %455 = vmatprep.subr.mxu0 0.0
  %456 = vmatpush1.msra.mxu0 %v421
  %457 = vmatprep.subr.mxu0 0.0
  %458 = vmatpush1.msra.mxu0 %v422
  %459 = vmatprep.subr.mxu0 0.0
  %460 = vmatpush1.msra.mxu0 %v423
  %461 = vmatprep.subr.mxu0 0.0
  %462 = vmatpush1.msra.mxu0 %v424
  %463 = vmatprep.subr.mxu0 0.0
  %464 = vmatpush1.msra.mxu0 %v425
  %465 = vmatprep.subr.mxu0 0.0
  %466 = vmatpush1.msra.mxu0 0.0
  %467 = vmatprep.subr.mxu0 0.0
  %468 = vmatpush1.msra.mxu0 0.0
  %469 = vmatprep.subr.mxu0 0.0
  %470 = vmatpush1.msra.mxu0 0.0
  %471 = vmatprep.subr.mxu0 0.0
  %472 = vmatpush1.msra.mxu0 0.0
  %473 = vmatprep.subr.mxu0 0.0
  %474 = vmatpush1.msra.mxu0 0.0
  %475 = vmatprep.subr.mxu0 0.0
  %476 = vmatpush1.msra.mxu0 0.0
  %477 = vmatprep.subr.mxu0 0.0
  %478 = vmatpush1.msra.mxu0 0.0
  %479 = vmatprep.subr.mxu0 0.0
  %480 = vmatpush1.msra.mxu0 0.0
  %481 = vmatprep.subr.mxu0 0.0
  %482 = vmatpush1.msra.mxu0 0.0
  %483 = vmatprep.subr.mxu0 0.0
  %484 = vmatpush1.msra.mxu0 0.0
  %485 = vmatprep.subr.mxu0 0.0
  %486 = vmatpush1.msra.mxu0 0.0
  %487 = vmatprep.subr.mxu0 0.0
  %488 = vmatpush1.msra.mxu0 0.0
  %489 = vmatprep.subr.mxu0 0.0
  %490 = vmatpush1.msra.mxu0 0.0
  %491 = vmatprep.subr.mxu0 0.0
  %492 = vmatpush1.msra.mxu0 0.0
  %493 = vmatprep.subr.mxu0 0.0
  %494 = vmatpush1.msra.mxu0 0.0
  %495 = vmatprep.subr.mxu0 0.0
  %496 = vmatpush1.msra.mxu0 0.0
  %497 = vmatprep.mubr.f32.mxu0 0.0
  %498 = vmatmul.mubr.f32.gmra.mrb[0].mxu0 %v409
  %v499 = vpop.f32.mrb[0].mxu0
  %v500 = vadd.f32 %v431, %v499
  %v501 = vpop.f32.mrb[0].mxu0
  %502 = vdwg.mxu0
  %v503 = vtanh.pop %v500
  %v504 = vld [vmem:[%s11] sm:$0xff]
  %v505 = vld [vmem:[%s11 + $0x8] sm:$0xff]
  %v506 = vld [vmem:[%s11 + $0x10] sm:$0xff]
  %v507 = vld [vmem:[%s11 + $0x18] sm:$0xff]
  %v508 = vld [vmem:[%s11 + $0x20] sm:$0xff]
  %v509 = vld [vmem:[%s11 + $0x28] sm:$0xff]
  %v510 = vld [vmem:[%s11 + $0x30] sm:$0xff]
  %v511 = vld [vmem:[%s11 + $0x38] sm:$0xff]
  %v512 = vld [vmem:[%s11 + $0x40] sm:$0xff]
  %v513 = vld [vmem:[%s11 + $0x48] sm:$0xff]
  %v514 = vld [vmem:[%s11 + $0x50] sm:$0xff]
  %v515 = vld [vmem:[%s11 + $0x58] sm:$0xff]
  %v516 = vld [vmem:[%s11 + $0x60] sm:$0xff]
  %v517 = vld [vmem:[%s11 + $0x68] sm:$0xff]
  %v518 = vld [vmem:[%s11 + $0x70] sm:$0xff]
  %v519 = vld [vmem:[%s11 + $0x78] sm:$0xff]
  %v520 = vld [vmem:[%s12] sm:$0x1]
  %v522 = vlaneseq
  %v523 = vshrl.u32 %v522, 7
  %v524 = vsub.s32 0, %v523
  %v525 = vrot.slane %v520, %v524
  %527 = vmatprep.subr.mxu0 0.0
  %528 = vmatpush1.msra.mxu0 %v504
  %529 = vmatprep.subr.mxu0 0.0
  %530 = vmatpush1.msra.mxu0 %v505
  %531 = vmatprep.subr.mxu0 0.0
  %532 = vmatpush1.msra.mxu0 %v506
  %533 = vmatprep.subr.mxu0 0.0
  %534 = vmatpush1.msra.mxu0 %v507
  %535 = vmatprep.subr.mxu0 0.0
  %536 = vmatpush1.msra.mxu0 %v508
  %537 = vmatprep.subr.mxu0 0.0
  %538 = vmatpush1.msra.mxu0 %v509
  %539 = vmatprep.subr.mxu0 0.0
  %540 = vmatpush1.msra.mxu0 %v510
  %541 = vmatprep.subr.mxu0 0.0
  %542 = vmatpush1.msra.mxu0 %v511
  %543 = vmatprep.subr.mxu0 0.0
  %544 = vmatpush1.msra.mxu0 %v512
  %545 = vmatprep.subr.mxu0 0.0
  %546 = vmatpush1.msra.mxu0 %v513
  %547 = vmatprep.subr.mxu0 0.0
  %548 = vmatpush1.msra.mxu0 %v514
  %549 = vmatprep.subr.mxu0 0.0
  %550 = vmatpush1.msra.mxu0 %v515
  %551 = vmatprep.subr.mxu0 0.0
  %552 = vmatpush1.msra.mxu0 %v516
  %553 = vmatprep.subr.mxu0 0.0
  %554 = vmatpush1.msra.mxu0 %v517
  %555 = vmatprep.subr.mxu0 0.0
  %556 = vmatpush1.msra.mxu0 %v518
  %557 = vmatprep.subr.mxu0 0.0
  %558 = vmatpush1.msra.mxu0 %v519
  %559 = vmatprep.subr.mxu0 0.0
  %560 = vmatpush1.msra.mxu0 0.0
  %561 = vmatprep.subr.mxu0 0.0
  %562 = vmatpush1.msra.mxu0 0.0
  %563 = vmatprep.subr.mxu0 0.0
  %564 = vmatpush1.msra.mxu0 0.0
  %565 = vmatprep.subr.mxu0 0.0
  %566 = vmatpush1.msra.mxu0 0.0
  %567 = vmatprep.subr.mxu0 0.0
  %568 = vmatpush1.msra.mxu0 0.0
  %569 = vmatprep.subr.mxu0 0.0
  %570 = vmatpush1.msra.mxu0 0.0
  %571 = vmatprep.subr.mxu0 0.0
  %572 = vmatpush1.msra.mxu0 0.0
  %573 = vmatprep.subr.mxu0 0.0
  %574 = vmatpush1.msra.mxu0 0.0
  %575 = vmatprep.subr.mxu0 0.0
  %576 = vmatpush1.msra.mxu0 0.0
  %577 = vmatprep.subr.mxu0 0.0
  %578 = vmatpush1.msra.mxu0 0.0
  %579 = vmatprep.subr.mxu0 0.0
  %580 = vmatpush1.msra.mxu0 0.0
  %581 = vmatprep.subr.mxu0 0.0
  %582 = vmatpush1.msra.mxu0 0.0
  %583 = vmatprep.subr.mxu0 0.0
  %584 = vmatpush1.msra.mxu0 0.0
  %585 = vmatprep.subr.mxu0 0.0
  %586 = vmatpush1.msra.mxu0 0.0
  %587 = vmatprep.subr.mxu0 0.0
  %588 = vmatpush1.msra.mxu0 0.0
  %589 = vmatprep.subr.mxu0 0.0
  %590 = vmatpush1.msra.mxu0 0.0
  %591 = vmatprep.mubr.f32.mxu0 0.0
  %592 = vmatmul.mubr.f32.gmra.mrb[0].mxu0 %v503
  %v593 = vpop.f32.mrb[0].mxu0
  %v594 = vadd.f32 %v525, %v593
  %v595 = vpop.f32.mrb[0].mxu0
  %596 = vdwg.mxu0
  %597 = vst.msk [vmem:[%s13] sm:$0xff] %vm53, %v594
  // Predicated region
  $region54: #{dnn_forward.1} parent=0 // pred_check
    _
  $region55: #{dnn_forward.1} parent=0 // pred_check_branch
    %599 = sbr.rel (0) target = $region57
  $region56: #{dnn_forward.1} parent=0 // pred_region
    _
  $region57: #{dnn_forward.1} parent=0 // pred_fallthru
    _
  // Predicated region
  $region58: #{dnn_forward.1} parent=0 // pred_check
    _
  $region59: #{dnn_forward.1} parent=0 // pred_check_branch
    %601 = sbr.rel (0) target = $region61
  $region60: #{dnn_forward.1} parent=0 // pred_region
    _
  $region61: #{dnn_forward.1} parent=0 // pred_fallthru
    _

</llo_original>
